<compile_context>
chip_gen: v7x
topology: tpu7x:2x2x1
jax: 0.10.0
libtpu: 0.0.40
codegen_flags: <defaults>
</compile_context>

<pallas_src>
import jax
import jax.numpy as jnp
from jax.experimental import pallas as pl
from jax.experimental.pallas import tpu as pltpu


# -----------------------------------------------------------------------------
# Kernel: lane-dense identity copy of one (row, col) tile.
# -----------------------------------------------------------------------------
def _copy_kernel(x_ref, o_ref):
    o_ref[...] = x_ref[...]


# -----------------------------------------------------------------------------
# Tiling helpers.
# -----------------------------------------------------------------------------
def _largest_divisor_tile(extent, quantum, cap):
    """Largest t <= cap with t % quantum == 0 and extent % t == 0.

    Assumes extent % quantum == 0.  Walks down from the cap so the search is
    bounded by cap / quantum iterations.
    """
    cap = min(extent, max(cap, quantum))
    t = (cap // quantum) * quantum
    while t >= quantum:
        if extent % t == 0:
            return t
        t -= quantum
    return quantum


def _pick_tiles(n_rows, n_cols, itemsize, target_block_bytes):
    """Choose a (row, col) block shape for a (n_rows, n_cols) array.

    col is a multiple of 128 dividing n_cols (or the full extent), row is a
    multiple of the dtype's sublane quantum dividing n_rows (or the full
    extent), and row * col * itemsize is kept near target_block_bytes.
    """
    target_elems = max(128, target_block_bytes // itemsize)
    sublane = 8 * max(1, 4 // itemsize)  # 8 (f32) / 16 (bf16) / 32 (int8)

    row_min = sublane if n_rows % sublane == 0 else n_rows
    if n_cols % 128 == 0:
        col = _largest_divisor_tile(n_cols, 128, max(128, target_elems // row_min))
    else:
        col = n_cols  # full extent is always a legal block dim

    if n_rows % sublane == 0:
        row = _largest_divisor_tile(n_rows, sublane, max(sublane, target_elems // col))
    else:
        row = n_rows  # full extent is always a legal block dim
    return row, col


# -----------------------------------------------------------------------------
# Wrapper: JAX/Pallas equivalent of View.forward(x) == x.view(x.shape[0], -1).
# -----------------------------------------------------------------------------
def view_flatten(x, *, target_block_bytes=2 << 20, donate_input=False):
    n = x.shape[0]
    d = 1
    for s in x.shape[1:]:
        d *= s

    # Row-major reshape of a contiguous array is free layout plumbing; the
    # Pallas kernel then materializes the lane-dense (N, D) slab tile by tile.
    x2d = x.reshape(n, d)

    itemsize = jnp.dtype(x.dtype).itemsize
    row, col = _pick_tiles(n, d, itemsize, target_block_bytes)
    block_bytes = row * col * itemsize
    # in + out, double-buffered, plus margin; raise above v5e's 16 MiB default
    # but stay within v7x's 64 MiB physical VMEM.
    vmem_limit = int(min(64 << 20, max(32 << 20, 6 * block_bytes)))

    spec = pl.BlockSpec((row, col), lambda i, j: (i, j))
    grid = (n // row, d // col)

    return pl.pallas_call(
        _copy_kernel,
        out_shape=jax.ShapeDtypeStruct((n, d), x.dtype),
        grid=grid,
        in_specs=[spec],
        out_specs=spec,
        input_output_aliases=({0: 0} if donate_input else {}),
        compiler_params=pltpu.CompilerParams(
            dimension_semantics=("parallel", "parallel"),
            vmem_limit_bytes=vmem_limit),
    )(x2d)


# -----------------------------------------------------------------------------
# Pure-JAX reference mirroring the PyTorch forward.
# -----------------------------------------------------------------------------
def reference_view(x):
    return x.reshape(x.shape[0], -1)


if __name__ == "__main__":
    key = jax.random.PRNGKey(0)
    k1, k2, k3 = jax.random.split(key, 3)

    # Primary shape implied by the module usage (batch=2, channels=4, spatial=16).
    x1 = jax.random.normal(k1, (2, 4, 16, 16), dtype=jnp.float32)
    y1 = view_flatten(x1)
    jax.block_until_ready(y1)
    assert y1.shape == (2, 4 * 16 * 16)
    assert jnp.array_equal(y1, reference_view(x1)), "f32 flatten mismatch"

    # Flattened width not a multiple of 128 -> full-extent lane-block fallback.
    x2 = jax.random.normal(k2, (3, 5, 7, 6), dtype=jnp.float32)
    y2 = view_flatten(x2)
    jax.block_until_ready(y2)
    assert jnp.array_equal(y2, reference_view(x2)), "irregular flatten mismatch"

    # bf16 input with a small block budget to exercise a multi-step lane grid.
    x3 = jax.random.normal(k3, (16, 4, 16, 128), dtype=jnp.bfloat16)
    y3 = view_flatten(x3, target_block_bytes=64 * 1024)
    jax.block_until_ready(y3)
    assert jnp.array_equal(y3, reference_view(x3)), "bf16 flatten mismatch"

    # Donated-input path (aliased output buffer).
    x4 = jax.random.normal(k1, (8, 2, 8, 128), dtype=jnp.float32)
    y4 = view_flatten(x4, donate_input=True)
    jax.block_until_ready(y4)
    assert jnp.array_equal(y4, reference_view(x4)), "aliased flatten mismatch"

    print("KERNEL_OK")
</pallas_src>

<mosaic_0001>
module attributes {stable_mosaic.version = 11 : i64} {
  func.func @_copy_kernel(%arg0: i32, %arg1: i32, %arg2: memref<2x1024xf32, #tpu.memory_space<vmem>>, %arg3: memref<2x1024xf32, #tpu.memory_space<vmem>>) attributes {dimension_semantics = [#tpu.dimension_semantics<parallel>, #tpu.dimension_semantics<parallel>], iteration_bounds = array<i64: 1, 1>, scalar_prefetch = 0 : i64, scratch_operands = 0 : i64, tpu.core_type = #tpu.core_type<tc>, window_params = [{transform_indices = @transform_0, window_bounds = array<i64: 2, 1024>}, {transform_indices = @transform_1, window_bounds = array<i64: 2, 1024>}]} {
    %c0 = arith.constant 0 : index
    %c0_0 = arith.constant 0 : index
    %0 = vector.load %arg2[%c0, %c0_0] : memref<2x1024xf32, #tpu.memory_space<vmem>>, vector<2x1024xf32>
    %c0_1 = arith.constant 0 : index
    %c0_2 = arith.constant 0 : index
    %1 = vector.load %arg3[%c0_1, %c0_2] : memref<2x1024xf32, #tpu.memory_space<vmem>>, vector<2x1024xf32>
    tpu.vector_store %arg3[%c0_1, %c0_2], %0 {strides = array<i32>} : memref<2x1024xf32, #tpu.memory_space<vmem>>, vector<2x1024xf32>,
    return
  }
  func.func @transform_0(%arg0: i32, %arg1: i32) -> (i32, i32) {
    %c0_i32 = arith.constant 0 : i32
    return %arg0, %arg1 : i32, i32
  }
  func.func @transform_1(%arg0: i32, %arg1: i32) -> (i32, i32) {
    %c0_i32 = arith.constant 0 : i32
    return %arg0, %arg1 : i32, i32
  }
}

</mosaic_0001>

<llo_original>
// kernel: tpu_custom_call.1
$region0: #{tpu_custom_call.1}
  #allocation0 [shape = 'u32[]', space=smem, size = 0x4, offset = 0x4, fixed_abs, tag = 'smem constant byte address 0x4 - core index']
  #allocation1 [shape = 'u32[144,128]{1,0:T(1,128)}', space=vmem, size = 0x12000, scoped, tag = 'internal scratch']
  %s0 = inlined_call_operand.hbm [shape: f32[2,1024], index: 0, kind: input, shape index: {}]
  %s1 = inlined_call_operand.hbm [shape: f32[2,1024], index: 1, kind: output, shape index: {}]
  %s2 = sld [smem:[#allocation0]]
  $region18: #{tpu_custom_call.1} parent=0
    _
  %s4 = ssub.s32 1, %s2
  %s5 = scalar_select 0, %s4, %s2
  $region1: #{tpu_custom_call.1} parent=0
    #allocation2 [shape = 'u8[8192]{0}', space=vmem, size = 0x2000, scoped, tag = 'input window, operand 0, single buffered']
    #allocation3 [shape = 's32[1]{0}', space=sflag, size = 0x4, scoped, tag = 'scoped memory for tpu_custom_call.1']
    #allocation4 [shape = 's32[1]{0}', space=sflag, size = 0x4, scoped, tag = 'scoped memory for tpu_custom_call.1']
    #allocation5 [shape = 'u8[8192]{0}', space=vmem, size = 0x2000, scoped, tag = 'output window, operand 0, single buffered']
    %6 = vsyncpa [#allocation3], 0
    %7 = vsyncpa [#allocation4], 0
    // Predicated region
    $region2: #{tpu_custom_call.1} parent=1 // pred_check
      _
    $region3: #{tpu_custom_call.1} parent=1 // pred_check_branch
      %9 = sbr.rel (0) target = $region5
    $region4: #{tpu_custom_call.1} parent=1 // pred_region
      %s11 = ssub.s32 256, 256
      %12 = vsyncadd [#allocation3], %s11
      %s14 = sshll.u32 [#allocation2], 4
      %s15 = int_to_ptr.vmem [resolvable:$true] %s14
      %17 = dma.hbm_to_vmem [thread:$0]  %s0, 256, %s15, [#allocation3]
    $region5: #{tpu_custom_call.1} parent=1 // pred_fallthru
      _
    // Predicated region
    $region6: #{tpu_custom_call.1} parent=1 // pred_check
      _
    $region7: #{tpu_custom_call.1} parent=1 // pred_check_branch
      %19 = sbr.rel (0) target = $region9
    $region8: #{tpu_custom_call.1} parent=1 // pred_region
      %20 = dma.done [#allocation3], 256
    $region9: #{tpu_custom_call.1} parent=1 // pred_fallthru
      _
    %v21 = vld [vmem:[#allocation2] sm:$0xff]
    %v22 = vld [vmem:[#allocation2 + $0x8] sm:$0xff]
    %23 = vst [vmem:[#allocation5] sm:$0xff] %v21
    %24 = vst [vmem:[#allocation5 + $0x8] sm:$0xff] %v22
    // Predicated region
    $region10: #{tpu_custom_call.1} parent=1 // pred_check
      _
    $region11: #{tpu_custom_call.1} parent=1 // pred_check_branch
      %26 = sbr.rel (0) target = $region13
    $region12: #{tpu_custom_call.1} parent=1 // pred_region
      %s28 = ssub.s32 256, 256
      %29 = vsyncadd [#allocation4], %s28
      %s31 = sshll.u32 [#allocation5], 4
      %s32 = int_to_ptr.vmem [resolvable:$true] %s31
      %34 = dma.vmem_to_hbm [thread:$0]  %s32, 256, %s1, [#allocation4]
    $region13: #{tpu_custom_call.1} parent=1 // pred_fallthru
      _
    // Predicated region
    $region14: #{tpu_custom_call.1} parent=1 // pred_check
      _
    $region15: #{tpu_custom_call.1} parent=1 // pred_check_branch
      %36 = sbr.rel (0) target = $region17
    $region16: #{tpu_custom_call.1} parent=1 // pred_region
      %37 = dma.done [#allocation4], 256
    $region17: #{tpu_custom_call.1} parent=1 // pred_fallthru
      _
    %38 = vsyncpa [#allocation3], 1
    %39 = vsyncpa [#allocation4], 1

</llo_original>
